<compile_context>
chip_gen: v7x
topology: tpu7x:2x2x1
jax: 0.10.0
libtpu: 0.0.40
codegen_flags: <defaults>
</compile_context>

<pallas_src>
import functools

import jax
import jax.numpy as jnp
from jax.experimental import pallas as pl
from jax.experimental.pallas import tpu as pltpu

COLS = 1024            # lane-dense minor dim (multiple of 128)
MAX_BLOCK_ROWS = 1024  # (1024, 1024) f32 block = 4 MiB per input per pipeline buffer


def _round_up(x, m):
    return (x + m - 1) // m * m


def _num_tensorcores():
    """Best-effort TensorCore count (2 on v7x, 1 on v5e/v6e); safe fallback 1."""
    try:
        info = pltpu.get_tpu_info()
    except Exception:
        return 1
    for name in ("num_cores", "core_count", "num_tensorcores", "tensorcores_per_chip"):
        n = getattr(info, name, None)
        if isinstance(n, int) and 1 <= n <= 8:
            return n
    return 1


def _dice_kernel(p_ref, t_ref, inter_ref, union_ref, acc_i, acc_u, *,
                 block_rows, blocks_per_core, valid_rows, needs_mask, acc_rows):
    i = pl.program_id(1)

    # Init this core's accumulators on the first step of the reduction axis.
    @pl.when(i == 0)
    def _():
        acc_i[...] = jnp.zeros_like(acc_i)
        acc_u[...] = jnp.zeros_like(acc_u)

    # Upcast in-register only; HBM traffic stays at the inputs' native dtypes.
    p = jax.nn.sigmoid(p_ref[...].astype(jnp.float32))
    t = t_ref[...].astype(jnp.float32)

    if needs_mask:
        # Zero rows past the valid extent (ragged last block / phantom blocks
        # on the extra-core tail).  Select (not multiply) so stale NaN/Inf in
        # the out-of-bounds region cannot leak through.
        g = pl.program_id(0) * blocks_per_core + i
        valid = valid_rows - g * block_rows
        row_ids = jax.lax.broadcasted_iota(jnp.int32, (block_rows, 1), 0)
        keep = row_ids < valid
        p = jnp.where(keep, p, 0.0)
        t = jnp.where(keep, t, 0.0)

    def colsum(x):
        # Fold the block onto the (acc_rows, COLS) accumulator with pure
        # full-vreg VALU adds; no per-step cross-sublane/cross-lane collapse.
        if block_rows == acc_rows:
            return x
        return jnp.sum(x.reshape(block_rows // acc_rows, acc_rows, COLS), axis=0)

    acc_i[...] += colsum(p * t)        # intersection partials
    acc_u[...] += colsum(p + t)        # union partials: sum(p)+sum(t) fused

    # Finalize: a single cross-sublane + cross-lane reduction per core.
    @pl.when(i == pl.num_programs(1) - 1)
    def _():
        inter = jnp.sum(acc_i[...])
        union = jnp.sum(acc_u[...])
        inter_ref[...] = jnp.full(inter_ref.shape, inter, dtype=jnp.float32)
        union_ref[...] = jnp.full(union_ref.shape, union, dtype=jnp.float32)


def _dice_partial_sums(p2, t2):
    """(sum(sigmoid(p)*t), sum(sigmoid(p)) + sum(t)) over a (rows, COLS) slab."""
    rows, cols = p2.shape
    assert cols == COLS

    ncores = _num_tensorcores()
    target_rows = pl.cdiv(rows, ncores)
    # Multiple of 32 keeps the sublane constraint satisfied for f32/bf16/int8.
    block_rows = min(MAX_BLOCK_ROWS, _round_up(target_rows, 32))
    if block_rows >= rows:
        block_rows = rows              # single full-extent block is always legal
    total_blocks = pl.cdiv(rows, block_rows)
    blocks_per_core = pl.cdiv(total_blocks, ncores)
    needs_mask = (ncores * blocks_per_core * block_rows) != rows
    acc_rows = 8 if block_rows % 8 == 0 else block_rows

    clamp = (ncores * blocks_per_core) > total_blocks
    last_block = total_blocks - 1

    def in_map(c, i):
        g = c * blocks_per_core + i
        if clamp:
            # Phantom blocks re-read the last real block (fully masked to 0).
            g = jnp.minimum(g, last_block)
        return (g, 0)

    kernel = functools.partial(
        _dice_kernel,
        block_rows=block_rows,
        blocks_per_core=blocks_per_core,
        valid_rows=rows,
        needs_mask=needs_mask,
        acc_rows=acc_rows,
    )

    # 2 inputs x double buffer + headroom for accumulators/outputs.
    in_bytes = 2 * block_rows * COLS * (p2.dtype.itemsize + t2.dtype.itemsize)
    vmem_limit = int(min(96 << 20, max(32 << 20, in_bytes + (8 << 20))))

    inter_p, union_p = pl.pallas_call(
        kernel,
        out_shape=(
            jax.ShapeDtypeStruct((ncores, 8, 128), jnp.float32),
            jax.ShapeDtypeStruct((ncores, 8, 128), jnp.float32),
        ),
        grid_spec=pltpu.PrefetchScalarGridSpec(
            num_scalar_prefetch=0,
            grid=(ncores, blocks_per_core),
            in_specs=[
                pl.BlockSpec((block_rows, COLS), in_map),
                pl.BlockSpec((block_rows, COLS), in_map),
            ],
            out_specs=[
                pl.BlockSpec((1, 8, 128), lambda c, i: (c, 0, 0)),
                pl.BlockSpec((1, 8, 128), lambda c, i: (c, 0, 0)),
            ],
            scratch_shapes=[
                pltpu.VMEM((acc_rows, COLS), jnp.float32),  # intersection partials
                pltpu.VMEM((acc_rows, COLS), jnp.float32),  # union partials
            ],
        ),
        compiler_params=pltpu.CompilerParams(
            # On v7x, axis 0 can be switched to pltpu.CORE_PARALLEL to force
            # the dual-TensorCore split explicitly; "parallel" is the portable
            # megacore annotation and is a no-op on single-TC chips.
            dimension_semantics=("parallel", "arbitrary"),
            vmem_limit_bytes=vmem_limit,
        ),
    )(p2, t2)

    return jnp.sum(inter_p[:, 0, 0]), jnp.sum(union_p[:, 0, 0])


def dice_loss(predictions, targets, smooth=1e-05):
    """loss = 1 - (2*sum(sigmoid(p)*t) + s) / (sum(sigmoid(p)) + sum(t) + s)."""
    assert predictions.shape == targets.shape
    # Flat views are free bitcasts; never upcast in the wrapper - the kernel
    # streams the inputs at their native dtypes (f32 / bf16 / int8 / bool).
    p_flat = predictions.reshape(-1)
    t_flat = targets.reshape(-1)
    total = p_flat.shape[0]

    rows = total // COLS
    tail = total - rows * COLS

    inter = jnp.float32(0.0)
    union = jnp.float32(0.0)

    if rows > 0:
        main = rows * COLS
        p_main = p_flat if tail == 0 else p_flat[:main]
        t_main = t_flat if tail == 0 else t_flat[:main]
        inter_k, union_k = _dice_partial_sums(
            p_main.reshape(rows, COLS), t_main.reshape(rows, COLS))
        inter = inter + inter_k
        union = union + union_k

    if tail > 0:
        # Sub-COLS remainder (< 1024 elements): tiny pure-JAX epilogue instead
        # of padding both inputs in HBM.
        p_tail = jax.nn.sigmoid(p_flat[rows * COLS:].astype(jnp.float32))
        t_tail = t_flat[rows * COLS:].astype(jnp.float32)
        inter = inter + jnp.sum(p_tail * t_tail)
        union = union + jnp.sum(p_tail) + jnp.sum(t_tail)

    s = jnp.float32(smooth)
    dice = (2.0 * inter + s) / (union + s)
    return (1.0 - dice).astype(jnp.float32)


def dice_loss_ref(predictions, targets, smooth=1e-05):
    p = jax.nn.sigmoid(predictions.astype(jnp.float32))
    n = predictions.shape[0]
    p = p.reshape(n, -1)
    t = targets.astype(jnp.float32).reshape(n, -1)
    inter = jnp.sum(p * t)
    union = jnp.sum(p) + jnp.sum(t)
    dice = (2.0 * inter + smooth) / (union + smooth)
    return 1.0 - dice


if __name__ == "__main__":
    key = jax.random.PRNGKey(0)
    kp, kt = jax.random.split(key)

    # NCHW, as the PyTorch module would receive from a segmentation net.
    shape = (2, 4, 16, 16)
    predictions = jax.random.normal(kp, shape, dtype=jnp.float32)
    targets = (jax.random.uniform(kt, shape) > 0.5).astype(jnp.float32)

    loss = jax.block_until_ready(dice_loss(predictions, targets))

    ref = dice_loss_ref(predictions, targets)
    assert jnp.allclose(loss, ref, atol=1e-5, rtol=1e-5), (loss, ref)

    print("KERNEL_OK")
</pallas_src>

<mosaic_0001>
module attributes {stable_mosaic.version = 11 : i64} {
  func.func @_dice_kernel(%arg0: i32, %arg1: i32, %arg2: memref<2x1024xf32, #tpu.memory_space<vmem>>, %arg3: memref<2x1024xf32, #tpu.memory_space<vmem>>, %arg4: memref<1x8x128xf32, #tpu.memory_space<vmem>>, %arg5: memref<1x8x128xf32, #tpu.memory_space<vmem>>, %arg6: memref<2x1024xf32, #tpu.memory_space<vmem>>, %arg7: memref<2x1024xf32, #tpu.memory_space<vmem>>) attributes {dimension_semantics = [#tpu.dimension_semantics<parallel>, #tpu.dimension_semantics<arbitrary>], iteration_bounds = array<i64: 1, 1>, scalar_prefetch = 0 : i64, scratch_operands = 2 : i64, tpu.core_type = #tpu.core_type<tc>, window_params = [{transform_indices = @transform_0, window_bounds = array<i64: 2, 1024>}, {transform_indices = @transform_1, window_bounds = array<i64: 2, 1024>}, {transform_indices = @transform_2, window_bounds = array<i64: 1, 8, 128>}, {transform_indices = @transform_3, window_bounds = array<i64: 1, 8, 128>}]} {
    %c0_i32 = arith.constant 0 : i32
    %0 = arith.cmpi eq, %arg1, %c0_i32 : i32
    %1 = arith.extui %0 : i1 to i32
    %c0_i32_0 = arith.constant 0 : i32
    %2 = arith.cmpi ne, %1, %c0_i32_0 : i32
    scf.if %2 {
      %cst_14 = arith.constant 0.000000e+00 : f32
      %21 = vector.broadcast %cst_14 : f32 to vector<2x1024xf32>
      %c0_15 = arith.constant 0 : index
      %c0_16 = arith.constant 0 : index
      %22 = vector.load %arg6[%c0_15, %c0_16] : memref<2x1024xf32, #tpu.memory_space<vmem>>, vector<2x1024xf32>
      tpu.vector_store %arg6[%c0_15, %c0_16], %21 {strides = array<i32>} : memref<2x1024xf32, #tpu.memory_space<vmem>>, vector<2x1024xf32>,
      %cst_17 = arith.constant 0.000000e+00 : f32
      %23 = vector.broadcast %cst_17 : f32 to vector<2x1024xf32>
      %c0_18 = arith.constant 0 : index
      %c0_19 = arith.constant 0 : index
      %24 = vector.load %arg7[%c0_18, %c0_19] : memref<2x1024xf32, #tpu.memory_space<vmem>>, vector<2x1024xf32>
      tpu.vector_store %arg7[%c0_18, %c0_19], %23 {strides = array<i32>} : memref<2x1024xf32, #tpu.memory_space<vmem>>, vector<2x1024xf32>,
    } else {
    }
    %c0 = arith.constant 0 : index
    %c0_1 = arith.constant 0 : index
    %3 = vector.load %arg2[%c0, %c0_1] : memref<2x1024xf32, #tpu.memory_space<vmem>>, vector<2x1024xf32>
    %4 = arith.negf %3 : vector<2x1024xf32>
    %5 = math.exp %4 : vector<2x1024xf32>
    %cst = arith.constant 1.000000e+00 : f32
    %6 = vector.broadcast %cst : f32 to vector<2x1024xf32>
    %7 = arith.addf %6, %5 : vector<2x1024xf32>
    %8 = arith.divf %6, %7 : vector<2x1024xf32>
    %c0_2 = arith.constant 0 : index
    %c0_3 = arith.constant 0 : index
    %9 = vector.load %arg3[%c0_2, %c0_3] : memref<2x1024xf32, #tpu.memory_space<vmem>>, vector<2x1024xf32>
    %c0_4 = arith.constant 0 : index
    %c0_5 = arith.constant 0 : index
    %10 = vector.load %arg6[%c0_4, %c0_5] : memref<2x1024xf32, #tpu.memory_space<vmem>>, vector<2x1024xf32>
    %11 = arith.mulf %8, %9 : vector<2x1024xf32>
    %12 = arith.addf %10, %11 : vector<2x1024xf32>
    %c0_6 = arith.constant 0 : index
    %c0_7 = arith.constant 0 : index
    %13 = vector.load %arg6[%c0_6, %c0_7] : memref<2x1024xf32, #tpu.memory_space<vmem>>, vector<2x1024xf32>
    tpu.vector_store %arg6[%c0_6, %c0_7], %12 {strides = array<i32>} : memref<2x1024xf32, #tpu.memory_space<vmem>>, vector<2x1024xf32>,
    %c0_8 = arith.constant 0 : index
    %c0_9 = arith.constant 0 : index
    %14 = vector.load %arg7[%c0_8, %c0_9] : memref<2x1024xf32, #tpu.memory_space<vmem>>, vector<2x1024xf32>
    %15 = arith.addf %8, %9 : vector<2x1024xf32>
    %16 = arith.addf %14, %15 : vector<2x1024xf32>
    %c0_10 = arith.constant 0 : index
    %c0_11 = arith.constant 0 : index
    %17 = vector.load %arg7[%c0_10, %c0_11] : memref<2x1024xf32, #tpu.memory_space<vmem>>, vector<2x1024xf32>
    tpu.vector_store %arg7[%c0_10, %c0_11], %16 {strides = array<i32>} : memref<2x1024xf32, #tpu.memory_space<vmem>>, vector<2x1024xf32>,
    %c0_i32_12 = arith.constant 0 : i32
    %18 = arith.cmpi eq, %arg1, %c0_i32_12 : i32
    %19 = arith.extui %18 : i1 to i32
    %c0_i32_13 = arith.constant 0 : i32
    %20 = arith.cmpi ne, %19, %c0_i32_13 : i32
    scf.if %20 {
      %c0_14 = arith.constant 0 : index
      %c0_15 = arith.constant 0 : index
      %21 = vector.load %arg6[%c0_14, %c0_15] : memref<2x1024xf32, #tpu.memory_space<vmem>>, vector<2x1024xf32>
      %22 = vector.shape_cast %21 : vector<2x1024xf32> to vector<1x2x1024xf32>
      %cst_16 = arith.constant dense<0.000000e+00> : vector<1xf32>
      %23 = vector.multi_reduction <add>, %22, %cst_16 [1, 2] : vector<1x2x1024xf32> to vector<1xf32>
      %24 = vector.shape_cast %23 : vector<1xf32> to vector<1x1x1xf32>
      %25 = vector.extract %24[0, 0, 0] : f32 from vector<1x1x1xf32>
      %c0_17 = arith.constant 0 : index
      %c0_18 = arith.constant 0 : index
      %26 = vector.load %arg7[%c0_17, %c0_18] : memref<2x1024xf32, #tpu.memory_space<vmem>>, vector<2x1024xf32>
      %27 = vector.shape_cast %26 : vector<2x1024xf32> to vector<1x2x1024xf32>
      %cst_19 = arith.constant dense<0.000000e+00> : vector<1xf32>
      %28 = vector.multi_reduction <add>, %27, %cst_19 [1, 2] : vector<1x2x1024xf32> to vector<1xf32>
      %29 = vector.shape_cast %28 : vector<1xf32> to vector<1x1x1xf32>
      %30 = vector.extract %29[0, 0, 0] : f32 from vector<1x1x1xf32>
      %31 = vector.broadcast %25 : f32 to vector<1x8x128xf32>
      %c0_20 = arith.constant 0 : index
      %c0_21 = arith.constant 0 : index
      %c0_22 = arith.constant 0 : index
      %32 = vector.load %arg4[%c0_20, %c0_21, %c0_22] : memref<1x8x128xf32, #tpu.memory_space<vmem>>, vector<1x8x128xf32>
      tpu.vector_store %arg4[%c0_20, %c0_21, %c0_22], %31 {strides = array<i32>} : memref<1x8x128xf32, #tpu.memory_space<vmem>>, vector<1x8x128xf32>,
      %33 = vector.broadcast %30 : f32 to vector<1x8x128xf32>
      %c0_23 = arith.constant 0 : index
      %c0_24 = arith.constant 0 : index
      %c0_25 = arith.constant 0 : index
      %34 = vector.load %arg5[%c0_23, %c0_24, %c0_25] : memref<1x8x128xf32, #tpu.memory_space<vmem>>, vector<1x8x128xf32>
      tpu.vector_store %arg5[%c0_23, %c0_24, %c0_25], %33 {strides = array<i32>} : memref<1x8x128xf32, #tpu.memory_space<vmem>>, vector<1x8x128xf32>,
    } else {
    }
    return
  }
  func.func @transform_0(%arg0: i32, %arg1: i32) -> (i32, i32) {
    %c1_i32 = arith.constant 1 : i32
    %0 = arith.muli %arg0, %c1_i32 : i32
    %1 = arith.addi %0, %arg1 : i32
    %c0_i32 = arith.constant 0 : i32
    %c0_i32_0 = arith.constant 0 : i32
    return %1, %c0_i32 : i32, i32
  }
  func.func @transform_1(%arg0: i32, %arg1: i32) -> (i32, i32) {
    %c1_i32 = arith.constant 1 : i32
    %0 = arith.muli %arg0, %c1_i32 : i32
    %1 = arith.addi %0, %arg1 : i32
    %c0_i32 = arith.constant 0 : i32
    %c0_i32_0 = arith.constant 0 : i32
    return %1, %c0_i32 : i32, i32
  }
  func.func @transform_2(%arg0: i32, %arg1: i32) -> (i32, i32, i32) {
    %c0_i32 = arith.constant 0 : i32
    %c0_i32_0 = arith.constant 0 : i32
    %c0_i32_1 = arith.constant 0 : i32
    return %arg0, %c0_i32, %c0_i32_0 : i32, i32, i32
  }
  func.func @transform_3(%arg0: i32, %arg1: i32) -> (i32, i32, i32) {
    %c0_i32 = arith.constant 0 : i32
    %c0_i32_0 = arith.constant 0 : i32
    %c0_i32_1 = arith.constant 0 : i32
    return %arg0, %c0_i32, %c0_i32_0 : i32, i32, i32
  }
}

</mosaic_0001>

<llo_original>
// kernel: tpu_custom_call.1
$region0: #{tpu_custom_call.1}
  #allocation0 [shape = 'u32[]', space=smem, size = 0x4, offset = 0x4, fixed_abs, tag = 'smem constant byte address 0x4 - core index']
  #allocation1 [shape = 'u32[144,128]{1,0:T(1,128)}', space=vmem, size = 0x12000, scoped, tag = 'internal scratch']
  #allocation2 [shape = 'f32[2,1024]{1,0:T(2,128)}', space=vmem, size = 0x2000, scoped, tag = 'scratch operand']
  #allocation3 [shape = 'f32[2,1024]{1,0:T(2,128)}', space=vmem, size = 0x2000, scoped, tag = 'scratch operand']
  %s0 = inlined_call_operand.hbm [shape: f32[2,1024], index: 0, kind: input, shape index: {}]
  %s1 = inlined_call_operand.hbm [shape: f32[2,1024], index: 1, kind: input, shape index: {}]
  %s2 = inlined_call_operand.hbm [shape: f32[1,8,128], index: 2, kind: output, shape index: {0}]
  %s3 = inlined_call_operand.hbm [shape: f32[1,8,128], index: 3, kind: output, shape index: {1}]
  %4 = xla_tuple %s2, %s3
  %s5 = sld [smem:[#allocation0]]
  $region42: #{tpu_custom_call.1} parent=0
    _
  %s7 = ssub.s32 1, %s5
  %s8 = scalar_select 0, %s7, %s5
  $region1: #{tpu_custom_call.1} parent=0
    #allocation4 [shape = 'u8[8192]{0}', space=vmem, size = 0x2000, scoped, tag = 'input window, operand 0, single buffered']
    #allocation5 [shape = 's32[1]{0}', space=sflag, size = 0x4, scoped, tag = 'scoped memory for tpu_custom_call.1']
    #allocation6 [shape = 's32[1]{0}', space=sflag, size = 0x4, scoped, tag = 'scoped memory for tpu_custom_call.1']
    #allocation7 [shape = 'u8[8192]{0}', space=vmem, size = 0x2000, scoped, tag = 'input window, operand 1, single buffered']
    #allocation8 [shape = 's32[1]{0}', space=sflag, size = 0x4, scoped, tag = 'scoped memory for tpu_custom_call.1']
    #allocation9 [shape = 'u8[4096]{0}', space=vmem, size = 0x1000, scoped, tag = 'output window, operand 0, single buffered']
    #allocation10 [shape = 'u8[4096]{0}', space=vmem, size = 0x1000, scoped, tag = 'output window, operand 1, single buffered']
    #allocation11 [shape = 's32[1]{0}', space=sflag, size = 0x4, scoped, tag = 'scoped memory for tpu_custom_call.1']
    %9 = vsyncpa [#allocation5], 0
    %10 = vsyncpa [#allocation8], 0
    %11 = vsyncpa [#allocation6], 0
    %12 = vsyncpa [#allocation11], 0
    // Predicated region
    $region2: #{tpu_custom_call.1} parent=1 // pred_check
      _
    $region3: #{tpu_custom_call.1} parent=1 // pred_check_branch
      %14 = sbr.rel (0) target = $region5
    $region4: #{tpu_custom_call.1} parent=1 // pred_region
      %s15 = sadd.s32 0, 0
      %s17 = ssub.s32 256, 256
      %18 = vsyncadd [#allocation5], %s17
      %s19 = smul.addr %s15, 8
      %s20 = smul.addr %s19, 32
      %s21 = scalar_lea.hbm %s0, %s20
      %s23 = sshll.u32 [#allocation4], 4
      %s24 = int_to_ptr.vmem [resolvable:$true] %s23
      %26 = dma.hbm_to_vmem [thread:$0]  %s21, 256, %s24, [#allocation5]
    $region5: #{tpu_custom_call.1} parent=1 // pred_fallthru
      _
    // Predicated region
    $region6: #{tpu_custom_call.1} parent=1 // pred_check
      _
    $region7: #{tpu_custom_call.1} parent=1 // pred_check_branch
      %28 = sbr.rel (0) target = $region9
    $region8: #{tpu_custom_call.1} parent=1 // pred_region
      %s29 = sadd.s32 0, 0
      %s31 = ssub.s32 256, 256
      %32 = vsyncadd [#allocation8], %s31
      %s33 = smul.addr %s29, 8
      %s34 = smul.addr %s33, 32
      %s35 = scalar_lea.hbm %s1, %s34
      %s37 = sshll.u32 [#allocation7], 4
      %s38 = int_to_ptr.vmem [resolvable:$true] %s37
      %40 = dma.hbm_to_vmem [thread:$0]  %s35, 256, %s38, [#allocation8]
    $region9: #{tpu_custom_call.1} parent=1 // pred_fallthru
      _
    // Predicated region
    $region10: #{tpu_custom_call.1} parent=1 // pred_check
      _
    $region11: #{tpu_custom_call.1} parent=1 // pred_check_branch
      %42 = sbr.rel (0) target = $region13
    $region12: #{tpu_custom_call.1} parent=1 // pred_region
      %43 = dma.done [#allocation5], 256
    $region13: #{tpu_custom_call.1} parent=1 // pred_fallthru
      _
    // Predicated region
    $region14: #{tpu_custom_call.1} parent=1 // pred_check
      _
    $region15: #{tpu_custom_call.1} parent=1 // pred_check_branch
      %45 = sbr.rel (0) target = $region17
    $region16: #{tpu_custom_call.1} parent=1 // pred_region
      %46 = dma.done [#allocation8], 256
    $region17: #{tpu_custom_call.1} parent=1 // pred_fallthru
      _
    %s47 = sadd.s32 0, 0
    %s48 = sadd.s32 0, 0
    %p49 = scmp.eq.s32.totalorder 0, 0
    // Predicated region
    $region18: #{tpu_custom_call.1} parent=1 // pred_check
      %p50 = pneg %p49
    $region19: #{tpu_custom_call.1} parent=1 // pred_check_branch
      %52 = sbr.rel (%p50) target = $region21
    $region20: #{tpu_custom_call.1} parent=1 // pred_region
      %53 = vst [vmem:[#allocation2] sm:$0xff] 0.0
      %54 = vst [vmem:[#allocation2 + $0x8] sm:$0xff] 0.0
      %55 = vst [vmem:[#allocation3] sm:$0xff] 0.0
      %56 = vst [vmem:[#allocation3 + $0x8] sm:$0xff] 0.0
    $region21: #{tpu_custom_call.1} parent=1 // pred_fallthru
      _
    %v57 = vld [vmem:[#allocation4] sm:$0xff]
    %v58 = vld [vmem:[#allocation4 + $0x8] sm:$0xff]
    %v59 = vxor.u32 %v57, 2147483648
    %v60 = vxor.u32 %v58, 2147483648
    %v61 = vmul.f32 %v59, 1.442695
    %v62 = vpow.pop %v61
    %v63 = vmul.f32 %v60, 1.442695
    %v64 = vpow.pop %v63
    %v65 = vadd.f32 %v62, 1.0
    %v66 = vadd.f32 %v64, 1.0
    %v67 = vrcp.pop %v65
    %v68 = vmul.f32 1.0, %v67
    %v69 = vrcp.pop %v66
    %v70 = vmul.f32 1.0, %v69
    %v71 = vld [vmem:[#allocation7] sm:$0xff]
    %v72 = vld [vmem:[#allocation7 + $0x8] sm:$0xff]
    %v73 = vld [vmem:[#allocation2] sm:$0xff]
    %v74 = vld [vmem:[#allocation2 + $0x8] sm:$0xff]
    %v75 = vmul.f32 %v68, %v71
    %v76 = vmul.f32 %v70, %v72
    %v77 = vadd.f32 %v73, %v75
    %v78 = vadd.f32 %v74, %v76
    %79 = vst [vmem:[#allocation2] sm:$0xff] %v77
    %80 = vst [vmem:[#allocation2 + $0x8] sm:$0xff] %v78
    %v81 = vld [vmem:[#allocation3] sm:$0xff]
    %v82 = vld [vmem:[#allocation3 + $0x8] sm:$0xff]
    %v83 = vadd.f32 %v68, %v71
    %v84 = vadd.f32 %v70, %v72
    %v85 = vadd.f32 %v81, %v83
    %v86 = vadd.f32 %v82, %v84
    %87 = vst [vmem:[#allocation3] sm:$0xff] %v85
    %88 = vst [vmem:[#allocation3 + $0x8] sm:$0xff] %v86
    // Predicated region
    $region22: #{tpu_custom_call.1} parent=1 // pred_check
      %p89 = pneg %p49
    $region23: #{tpu_custom_call.1} parent=1 // pred_check_branch
      %91 = sbr.rel (%p89) target = $region25
    $region24: #{tpu_custom_call.1} parent=1 // pred_region
      %v92 = vld [vmem:[#allocation2] sm:$0xff]
      %v93 = vld [vmem:[#allocation2 + $0x8] sm:$0xff]
      %v96 = vcombine.high %v92, %v92
      %v98 = vunpack.c.l.s4 1983009808
      %v99 = vunpack.c.0.s8 %v98
      %v100 = vlaneseq
      %v101 = vshrl.u32 %v100, 7
      %v102 = vsub.s32 %v99, %v101
      %v103 = vrot.slane %v92, %v102
      %v105 = vunpack.c.l.s4 1983009808
      %v106 = vunpack.c.0.s8 %v105
      %v107 = vlaneseq
      %v108 = vshrl.u32 %v107, 7
      %v109 = vsub.s32 %v106, %v108
      %v110 = vrot.slane %v96, %v109
      %v111 = vcombine.high %v103, %v103
      %v112 = vcombine.high %v110, %v110
      %v113 = vcombine.high %v93, %v93
      %v115 = vunpack.c.l.s4 1983009808
      %v116 = vunpack.c.0.s8 %v115
      %v117 = vlaneseq
      %v118 = vshrl.u32 %v117, 7
      %v119 = vsub.s32 %v116, %v118
      %v120 = vrot.slane %v93, %v119
      %v122 = vunpack.c.l.s4 1983009808
      %v123 = vunpack.c.0.s8 %v122
      %v124 = vlaneseq
      %v125 = vshrl.u32 %v124, 7
      %v126 = vsub.s32 %v123, %v125
      %v127 = vrot.slane %v113, %v126
      %v128 = vcombine.high %v120, %v120
      %v129 = vcombine.high %v127, %v127
      %vm138 = vcmask 1041408
      %v139 = vsel %vm138, %v103, 0.0
      %v140 = vsel %vm138, %v111, 0.0
      %v141 = vadd.f32 %v139, %v140
      %v142 = vsel %vm138, %v110, 0.0
      %v143 = vadd.f32 %v141, %v142
      %v144 = vsel %vm138, %v112, 0.0
      %v145 = vadd.f32 %v143, %v144
      %v146 = vsel %vm138, %v120, 0.0
      %v147 = vadd.f32 %v145, %v146
      %v148 = vsel %vm138, %v128, 0.0
      %v149 = vadd.f32 %v147, %v148
      %v150 = vsel %vm138, %v127, 0.0
      %v151 = vadd.f32 %v149, %v150
      %v152 = vsel %vm138, %v129, 0.0
      %v153 = vadd.f32 %v151, %v152
      %154 = vadd.xlane.f32.xlu0 %v153
      %v155 = vpop.xlane.xlu0 %154
      %v156 = vrot.slane %v155, 4
      %v157 = vadd.f32 %v155, %v156
      %v158 = vrot.slane %v157, 2
      %v159 = vadd.f32 %v157, %v158
      %v160 = vrot.slane %v159, 1
      %v161 = vadd.f32 %v159, %v160
      %s162 = vtos %v161
      %v163 = vld [vmem:[#allocation3] sm:$0xff]
      %v164 = vld [vmem:[#allocation3 + $0x8] sm:$0xff]
      %v167 = vcombine.high %v163, %v163
      %v169 = vunpack.c.l.s4 1983009808
      %v170 = vunpack.c.0.s8 %v169
      %v171 = vlaneseq
      %v172 = vshrl.u32 %v171, 7
      %v173 = vsub.s32 %v170, %v172
      %v174 = vrot.slane %v163, %v173
      %v176 = vunpack.c.l.s4 1983009808
      %v177 = vunpack.c.0.s8 %v176
      %v178 = vlaneseq
      %v179 = vshrl.u32 %v178, 7
      %v180 = vsub.s32 %v177, %v179
      %v181 = vrot.slane %v167, %v180
      %v182 = vcombine.high %v174, %v174
      %v183 = vcombine.high %v181, %v181
      %v184 = vcombine.high %v164, %v164
      %v186 = vunpack.c.l.s4 1983009808
      %v187 = vunpack.c.0.s8 %v186
      %v188 = vlaneseq
      %v189 = vshrl.u32 %v188, 7
      %v190 = vsub.s32 %v187, %v189
      %v191 = vrot.slane %v164, %v190
      %v193 = vunpack.c.l.s4 1983009808
      %v194 = vunpack.c.0.s8 %v193
      %v195 = vlaneseq
      %v196 = vshrl.u32 %v195, 7
      %v197 = vsub.s32 %v194, %v196
      %v198 = vrot.slane %v184, %v197
      %v199 = vcombine.high %v191, %v191
      %v200 = vcombine.high %v198, %v198
      %v209 = vsel %vm138, %v174, 0.0
      %v210 = vsel %vm138, %v182, 0.0
      %v211 = vadd.f32 %v209, %v210
      %v212 = vsel %vm138, %v181, 0.0
      %v213 = vadd.f32 %v211, %v212
      %v214 = vsel %vm138, %v183, 0.0
      %v215 = vadd.f32 %v213, %v214
      %v216 = vsel %vm138, %v191, 0.0
      %v217 = vadd.f32 %v215, %v216
      %v218 = vsel %vm138, %v199, 0.0
      %v219 = vadd.f32 %v217, %v218
      %v220 = vsel %vm138, %v198, 0.0
      %v221 = vadd.f32 %v219, %v220
      %v222 = vsel %vm138, %v200, 0.0
      %v223 = vadd.f32 %v221, %v222
      %224 = vadd.xlane.f32.xlu0 %v223
      %v225 = vpop.xlane.xlu0 %224
      %v226 = vrot.slane %v225, 4
      %v227 = vadd.f32 %v225, %v226
      %v228 = vrot.slane %v227, 2
      %v229 = vadd.f32 %v227, %v228
      %v230 = vrot.slane %v229, 1
      %v231 = vadd.f32 %v229, %v230
      %s232 = vtos %v231
      %v233 = vstv %s162
      %234 = vst [vmem:[#allocation9] sm:$0xff] %v233
      %v235 = vstv %s232
      %236 = vst [vmem:[#allocation10] sm:$0xff] %v235
    $region25: #{tpu_custom_call.1} parent=1 // pred_fallthru
      _
    // Predicated region
    $region26: #{tpu_custom_call.1} parent=1 // pred_check
      _
    $region27: #{tpu_custom_call.1} parent=1 // pred_check_branch
      %238 = sbr.rel (0) target = $region29
    $region28: #{tpu_custom_call.1} parent=1 // pred_region
      %s240 = ssub.s32 128, 128
      %241 = vsyncadd [#allocation6], %s240
      %s243 = sshll.u32 [#allocation9], 4
      %s244 = int_to_ptr.vmem [resolvable:$true] %s243
      %246 = dma.vmem_to_hbm [thread:$0]  %s244, 128, %s2, [#allocation6]
    $region29: #{tpu_custom_call.1} parent=1 // pred_fallthru
      _
    // Predicated region
    $region30: #{tpu_custom_call.1} parent=1 // pred_check
      _
    $region31: #{tpu_custom_call.1} parent=1 // pred_check_branch
      %248 = sbr.rel (0) target = $region33
    $region32: #{tpu_custom_call.1} parent=1 // pred_region
      %s250 = ssub.s32 128, 128
      %251 = vsyncadd [#allocation11], %s250
      %s253 = sshll.u32 [#allocation10], 4
      %s254 = int_to_ptr.vmem [resolvable:$true] %s253
      %256 = dma.vmem_to_hbm [thread:$0]  %s254, 128, %s3, [#allocation11]
    $region33: #{tpu_custom_call.1} parent=1 // pred_fallthru
      _
    // Predicated region
    $region34: #{tpu_custom_call.1} parent=1 // pred_check
      _
    $region35: #{tpu_custom_call.1} parent=1 // pred_check_branch
      %258 = sbr.rel (0) target = $region37
    $region36: #{tpu_custom_call.1} parent=1 // pred_region
      %259 = dma.done [#allocation6], 128
    $region37: #{tpu_custom_call.1} parent=1 // pred_fallthru
      _
    // Predicated region
    $region38: #{tpu_custom_call.1} parent=1 // pred_check
      _
    $region39: #{tpu_custom_call.1} parent=1 // pred_check_branch
      %261 = sbr.rel (0) target = $region41
    $region40: #{tpu_custom_call.1} parent=1 // pred_region
      %262 = dma.done [#allocation11], 128
    $region41: #{tpu_custom_call.1} parent=1 // pred_fallthru
      _
    %263 = vsyncpa [#allocation5], 1
    %264 = vsyncpa [#allocation8], 1
    %265 = vsyncpa [#allocation6], 1
    %266 = vsyncpa [#allocation11], 1

</llo_original>
